<compile_context>
chip_gen: v7x
topology: tpu7x:2x2x1
jax: 0.10.0
libtpu: 0.0.40
codegen_flags: <defaults>
</compile_context>

<pallas_src>
import functools

import jax
import jax.numpy as jnp
from jax import lax
from jax.experimental import pallas as pl
from jax.experimental.pallas import tpu as pltpu


def _mqa_flash_kernel(q_ref, k_ref, v_ref, wq_ref, bq_ref, wo_ref, bo_ref,
                      o_ref, q2_scr, att_scr, m_scr, l_scr, acc_scr,
                      *, num_heads, hidden_dim, scale):
    d = hidden_dim // num_heads
    tq = q_ref.shape[0]
    cdt = wq_ref.dtype          # compute dtype for MXU operands (bf16 by default)
    kv_step = pl.program_id(2)

    @pl.when(kv_step == 0)
    def _init():
        # Project + scale the query tile ONCE per (batch, query-tile), f32 accum.
        # NOTE: the PyTorch module scales by sqrt(hidden_dim), not sqrt(head_dim).
        Q = jnp.dot(q_ref[...], wq_ref[...],
                    preferred_element_type=jnp.float32) + bq_ref[...]   # (TQ, Dh)
        Qs = Q * scale
        # Fold heads into the MXU M dim: (TQ, H*d) -> (H*TQ, d) bf16 scratch slab
        # (static sliced stores; avoids an in-register reshape/relayout).
        for h in range(num_heads):
            q2_scr[h * tq:(h + 1) * tq, :] = Qs[:, h * d:(h + 1) * d].astype(cdt)
        # Online-softmax state.
        m_scr[...] = jnp.full_like(m_scr, -jnp.inf)
        l_scr[...] = jnp.zeros_like(l_scr)
        acc_scr[...] = jnp.zeros_like(acc_scr)

    # ---- online-softmax update for this Sk tile (all heads in one matmul) ----
    kb = k_ref[...]                                                   # (TK, d) bf16
    vb = v_ref[...]                                                   # (TK, d) bf16
    s = lax.dot_general(q2_scr[...], kb, (((1,), (1,)), ((), ())),
                        preferred_element_type=jnp.float32)           # (H*TQ, TK)
    m_new = jnp.maximum(m_scr[...], jnp.max(s, axis=-1, keepdims=True))
    alpha = jnp.exp(m_scr[...] - m_new)
    p = jnp.exp(s - m_new)
    l_scr[...] = alpha * l_scr[...] + jnp.sum(p, axis=-1, keepdims=True)
    acc_scr[...] = alpha * acc_scr[...] + jnp.dot(
        p.astype(cdt), vb, preferred_element_type=jnp.float32)        # (H*TQ, d)
    m_scr[...] = m_new

    @pl.when(kv_step == pl.num_programs(2) - 1)
    def _finalize():
        att = acc_scr[...] * pl.reciprocal(l_scr[...], approx=True)   # (H*TQ, d)
        # Unfold heads back to (TQ, Dh) via sliced scratch writes (no lane concat).
        for h in range(num_heads):
            att_scr[:, h * d:(h + 1) * d] = att[h * tq:(h + 1) * tq, :].astype(cdt)
        out = jnp.dot(att_scr[...], wo_ref[...],
                      preferred_element_type=jnp.float32) + bo_ref[...]
        o_ref[...] = out.astype(o_ref.dtype)


def _choose_block(size, desired):
    """Largest tile <= desired that divides size and respects sublane tiling."""
    if size <= desired:
        return size
    for t in range(desired, 0, -1):
        if size % t == 0 and (t % 8 == 0 or t == size):
            return t
    return size


def mqa_forward(query, key, value, params, *, num_heads, hidden_dim,
                block_q=None, block_k=None, compute_dtype=jnp.bfloat16):
    """query/key/value: (B, S, input_dim) float32.  Returns (B, Sq, input_dim) float32."""
    B, Sq, Din = query.shape
    Sk = key.shape[1]
    Dh = hidden_dim
    d = hidden_dim // num_heads
    H = num_heads

    wq, bq, wk, bk, wv, bv, wo, bo = params
    out_dim = wo.shape[1]                       # == input_dim for this module

    # ---- per-generation sizing (v5e/v6e: 128 MiB VMEM; v7x: 64 MiB) ----------
    try:
        info = pltpu.get_tpu_info()
        vmem_cap = getattr(info, "vmem_capacity_bytes", 64 * 1024 * 1024)
    except Exception:
        vmem_cap = 64 * 1024 * 1024
    big_vmem = vmem_cap >= 100 * 1024 * 1024
    vmem_limit = (96 if big_vmem else 48) * 1024 * 1024
    if block_q is None:
        block_q = 512 if big_vmem else 256
    if block_k is None:
        block_k = 1024 if big_vmem else 512

    # ---- K/V projections hoisted out of the kernel ---------------------------
    # Tiny (Din -> d) matmuls; the kernel then streams (Sk, d) bf16 tiles instead
    # of re-projecting (Sk, Din) per query tile.
    k_proj = (key @ wk + bk).astype(compute_dtype)       # (B, Sk, d)
    v_proj = (value @ wv + bv).astype(compute_dtype)     # (B, Sk, d)

    # Lane-dense output: pad the output projection to a multiple of 128 lanes
    # (unmasked vst); the padding is sliced off after the kernel.
    dpad = ((out_dim + 127) // 128) * 128
    if dpad != out_dim:
        wo = jnp.pad(wo, ((0, 0), (0, dpad - out_dim)))
        bo = jnp.pad(bo, ((0, 0), (0, dpad - out_dim)))

    cdt = compute_dtype
    qc = query.astype(cdt)
    wqc, woc = wq.astype(cdt), wo.astype(cdt)
    bq32, bo32 = bq.astype(jnp.float32), bo.astype(jnp.float32)

    tq = _choose_block(Sq, block_q)
    tk = _choose_block(Sk, block_k)
    nq = Sq // tq
    nk = Sk // tk
    scale = 1.0 / (hidden_dim ** 0.5)

    kernel = functools.partial(_mqa_flash_kernel, num_heads=num_heads,
                               hidden_dim=hidden_dim, scale=scale)

    def const_spec(r, c):
        # Grid-invariant weight/bias block: fetched once, single-buffered so it
        # does not pay for a second (unused) pipeline buffer in VMEM.
        return pl.BlockSpec((r, c), lambda b, i, k: (0, 0),
                            pipeline_mode=pl.Buffered(1))

    # Advisory cost estimate so XLA schedules surrounding ops sensibly.
    flops = (2 * B * Sq * Din * Dh                      # Q projection
             + 4 * B * H * Sq * Sk * d                  # QK^T + PV
             + 2 * B * Sq * Dh * dpad)                  # output projection
    bytes_accessed = int(
        B * Sq * Din * 2                                # query tiles (bf16)
        + 2 * B * Sk * d * 2 * nq                       # K/V tiles re-streamed per q tile
        + (Din * Dh + Dh * dpad) * 2 + (Dh + dpad) * 4  # weights + biases
        + B * Sq * dpad * 4)                            # f32 output
    cost = pl.CostEstimate(flops=flops,
                           transcendentals=B * H * Sq * Sk,
                           bytes_accessed=bytes_accessed)

    out_p = pl.pallas_call(
        kernel,
        out_shape=jax.ShapeDtypeStruct((B, Sq, dpad), jnp.float32),
        grid_spec=pltpu.PrefetchScalarGridSpec(
            num_scalar_prefetch=0,
            grid=(B, nq, nk),
            in_specs=[
                pl.BlockSpec((pl.Squeezed(), tq, Din), lambda b, i, k: (b, i, 0)),  # query tile
                pl.BlockSpec((pl.Squeezed(), tk, d), lambda b, i, k: (b, k, 0)),    # K tile
                pl.BlockSpec((pl.Squeezed(), tk, d), lambda b, i, k: (b, k, 0)),    # V tile
                const_spec(Din, Dh),  const_spec(1, Dh),                            # wq, bq
                const_spec(Dh, dpad), const_spec(1, dpad),                          # wo, bo (padded)
            ],
            out_specs=pl.BlockSpec((pl.Squeezed(), tq, dpad),
                                   lambda b, i, k: (b, i, 0)),
            scratch_shapes=[
                pltpu.VMEM((H * tq, d), cdt),           # head-folded scaled Q slab (bf16)
                pltpu.VMEM((tq, Dh), cdt),              # attended-values slab (bf16)
                pltpu.VMEM((H * tq, 1), jnp.float32),   # running row max
                pltpu.VMEM((H * tq, 1), jnp.float32),   # running denominator
                pltpu.VMEM((H * tq, d), jnp.float32),   # output accumulator
            ],
        ),
        compiler_params=pltpu.CompilerParams(
            # Sk axis is a reduction (accumulator in scratch) => "arbitrary", last.
            dimension_semantics=("parallel", "parallel", "arbitrary"),
            vmem_limit_bytes=vmem_limit,
        ),
        cost_estimate=cost,
    )(qc, k_proj, v_proj, wqc, bq32, woc, bo32)

    return out_p[:, :, :out_dim]


def mqa_reference(query, key, value, params, *, num_heads, hidden_dim):
    """Pure-JAX reference mirroring the PyTorch forward exactly (mask=None)."""
    wq, bq, wk, bk, wv, bv, wo, bo = params
    B, Sq, _ = query.shape
    d = hidden_dim // num_heads
    Q = query @ wq + bq                       # (B, Sq, Dh)
    K = key @ wk + bk                         # (B, Sk, d)
    V = value @ wv + bv                       # (B, Sk, d)
    Q = Q.reshape(B, Sq, num_heads, d)
    scores = jnp.einsum('bqhd,bkd->bhqk', Q, K) / (hidden_dim ** 0.5)
    w = jax.nn.softmax(scores, axis=-1)
    att = jnp.einsum('bhqk,bkd->bqhd', w, V).reshape(B, Sq, hidden_dim)
    return att @ wo + bo


def init_params(key, input_dim, hidden_dim, num_heads):
    """Deterministic init mimicking nn.Linear default (uniform +/- 1/sqrt(fan_in))."""
    d = hidden_dim // num_heads
    shapes = [
        (input_dim, hidden_dim), (1, hidden_dim),   # query_linear
        (input_dim, d),          (1, d),            # key_linear
        (input_dim, d),          (1, d),            # value_linear
        (hidden_dim, input_dim), (1, input_dim),    # output_linear
    ]
    fan_ins = [input_dim, input_dim, input_dim, input_dim,
               input_dim, input_dim, hidden_dim, hidden_dim]
    keys = jax.random.split(key, len(shapes))
    params = []
    for k, s, fi in zip(keys, shapes, fan_ins):
        bound = 1.0 / (fi ** 0.5)
        params.append(jax.random.uniform(k, s, jnp.float32, -bound, bound))
    return tuple(params)


if __name__ == "__main__":
    # Small, module-consistent shapes.
    B, S = 2, 8
    input_dim, hidden_dim, num_heads = 32, 32, 4

    root = jax.random.PRNGKey(0)
    kp, kq, kk, kv = jax.random.split(root, 4)
    params = init_params(kp, input_dim, hidden_dim, num_heads)

    query = jax.random.normal(kq, (B, S, input_dim), jnp.float32)
    key = jax.random.normal(kk, (B, S, input_dim), jnp.float32)
    value = jax.random.normal(kv, (B, S, input_dim), jnp.float32)

    out = mqa_forward(query, key, value, params,
                      num_heads=num_heads, hidden_dim=hidden_dim)
    out = jax.block_until_ready(out)

    # Reference computed on bf16-rounded activations/weights (isolates only the
    # in-kernel bf16 / approx-reciprocal rounding).
    def rto(x):
        return x.astype(jnp.bfloat16).astype(jnp.float32)

    wq, bq, wk, bk, wv, bv, wo, bo = params
    params_r = (rto(wq), bq, rto(wk), bk, rto(wv), bv, rto(wo), bo)
    ref = mqa_reference(rto(query), rto(key), rto(value), params_r,
                        num_heads=num_heads, hidden_dim=hidden_dim)

    assert out.shape == (B, S, input_dim)
    assert jnp.allclose(out, ref, atol=3e-2, rtol=3e-2), "mismatch vs reference"

    print("KERNEL_OK")
</pallas_src>

<mosaic_0001>
module attributes {stable_mosaic.version = 11 : i64} {
  func.func @_mqa_flash_kernel(%arg0: i32, %arg1: i32, %arg2: i32, %arg3: memref<1x8x32xbf16, #tpu.memory_space<vmem>>, %arg4: memref<1x8x8xbf16, #tpu.memory_space<vmem>>, %arg5: memref<1x8x8xbf16, #tpu.memory_space<vmem>>, %arg6: memref<32x32xbf16, #tpu.memory_space<vmem>>, %arg7: memref<1x32xf32, #tpu.memory_space<vmem>>, %arg8: memref<32x128xbf16, #tpu.memory_space<vmem>>, %arg9: memref<1x128xf32, #tpu.memory_space<vmem>>, %arg10: memref<1x8x128xf32, #tpu.memory_space<vmem>>, %arg11: memref<32x8xbf16, #tpu.memory_space<vmem>>, %arg12: memref<8x32xbf16, #tpu.memory_space<vmem>>, %arg13: memref<32x1xf32, #tpu.memory_space<vmem>>, %arg14: memref<32x1xf32, #tpu.memory_space<vmem>>, %arg15: memref<32x8xf32, #tpu.memory_space<vmem>>) attributes {dimension_semantics = [#tpu.dimension_semantics<parallel>, #tpu.dimension_semantics<parallel>, #tpu.dimension_semantics<arbitrary>], iteration_bounds = array<i64: 2, 1, 1>, scalar_prefetch = 0 : i64, scratch_operands = 5 : i64, tpu.core_type = #tpu.core_type<tc>, window_params = [{transform_indices = @transform_0, window_bounds = array<i64: 1, 8, 32>}, {transform_indices = @transform_1, window_bounds = array<i64: 1, 8, 8>}, {transform_indices = @transform_2, window_bounds = array<i64: 1, 8, 8>}, {pipeline_mode = #tpu.pipeline_mode<synchronous>, transform_indices = @transform_3, window_bounds = array<i64: 32, 32>}, {pipeline_mode = #tpu.pipeline_mode<synchronous>, transform_indices = @transform_4, window_bounds = array<i64: 1, 32>}, {pipeline_mode = #tpu.pipeline_mode<synchronous>, transform_indices = @transform_5, window_bounds = array<i64: 32, 128>}, {pipeline_mode = #tpu.pipeline_mode<synchronous>, transform_indices = @transform_6, window_bounds = array<i64: 1, 128>}, {transform_indices = @transform_7, window_bounds = array<i64: 1, 8, 128>}]} {
    %c0_i32 = arith.constant 0 : i32
    %0 = arith.cmpi eq, %arg2, %c0_i32 : i32
    %1 = arith.extui %0 : i1 to i32
    %c0_i32_0 = arith.constant 0 : i32
    %2 = arith.cmpi ne, %1, %c0_i32_0 : i32
    scf.if %2 {
      %c0_27 = arith.constant 0 : index
      %c0_28 = arith.constant 0 : index
      %c0_29 = arith.constant 0 : index
      %36 = vector.load %arg3[%c0_27, %c0_28, %c0_29] : memref<1x8x32xbf16, #tpu.memory_space<vmem>>, vector<1x8x32xbf16>
      %37 = vector.shape_cast %36 : vector<1x8x32xbf16> to vector<8x32xbf16>
      %c0_30 = arith.constant 0 : index
      %c0_31 = arith.constant 0 : index
      %38 = vector.load %arg6[%c0_30, %c0_31] : memref<32x32xbf16, #tpu.memory_space<vmem>>, vector<32x32xbf16>
      %cst_32 = arith.constant dense<0.000000e+00> : vector<8x32xf32>
      %39 = tpu.matmul %37, %38, %cst_32 {dimension_numbers = #tpu.dot_dimension_numbers<[1], [0], [0], [1], [0, 0, 1, 1], [], []>} : vector<8x32xbf16>, vector<32x32xbf16>, vector<8x32xf32> -> vector<8x32xf32>
      %c0_33 = arith.constant 0 : index
      %c0_34 = arith.constant 0 : index
      %40 = vector.load %arg7[%c0_33, %c0_34] : memref<1x32xf32, #tpu.memory_space<vmem>>, vector<1x32xf32>
      %41 = vector.broadcast %40 : vector<1x32xf32> to vector<8x32xf32>
      %42 = arith.addf %39, %41 : vector<8x32xf32>
      %cst_35 = arith.constant 0.176776692 : f32
      %43 = vector.broadcast %cst_35 : f32 to vector<8x32xf32>
      %44 = arith.mulf %42, %43 : vector<8x32xf32>
      %45 = vector.extract_strided_slice %44 {offsets = [0, 0], sizes = [8, 8], strides = [1, 1]} : vector<8x32xf32> to vector<8x8xf32>
      %46 = arith.truncf %45 : vector<8x8xf32> to vector<8x8xbf16>
      %c0_36 = arith.constant 0 : index
      %c0_37 = arith.constant 0 : index
      %47 = vector.load %arg11[%c0_36, %c0_37] : memref<32x8xbf16, #tpu.memory_space<vmem>>, vector<8x8xbf16>
      tpu.vector_store %arg11[%c0_36, %c0_37], %46 {strides = array<i32>} : memref<32x8xbf16, #tpu.memory_space<vmem>>, vector<8x8xbf16>,
      %48 = vector.extract_strided_slice %44 {offsets = [0, 8], sizes = [8, 8], strides = [1, 1]} : vector<8x32xf32> to vector<8x8xf32>
      %49 = arith.truncf %48 : vector<8x8xf32> to vector<8x8xbf16>
      %c8 = arith.constant 8 : index
      %c0_38 = arith.constant 0 : index
      %50 = vector.load %arg11[%c8, %c0_38] : memref<32x8xbf16, #tpu.memory_space<vmem>>, vector<8x8xbf16>
      tpu.vector_store %arg11[%c8, %c0_38], %49 {strides = array<i32>} : memref<32x8xbf16, #tpu.memory_space<vmem>>, vector<8x8xbf16>,
      %51 = vector.extract_strided_slice %44 {offsets = [0, 16], sizes = [8, 8], strides = [1, 1]} : vector<8x32xf32> to vector<8x8xf32>
      %52 = arith.truncf %51 : vector<8x8xf32> to vector<8x8xbf16>
      %c16 = arith.constant 16 : index
      %c0_39 = arith.constant 0 : index
      %53 = vector.load %arg11[%c16, %c0_39] : memref<32x8xbf16, #tpu.memory_space<vmem>>, vector<8x8xbf16>
      tpu.vector_store %arg11[%c16, %c0_39], %52 {strides = array<i32>} : memref<32x8xbf16, #tpu.memory_space<vmem>>, vector<8x8xbf16>,
      %54 = vector.extract_strided_slice %44 {offsets = [0, 24], sizes = [8, 8], strides = [1, 1]} : vector<8x32xf32> to vector<8x8xf32>
      %55 = arith.truncf %54 : vector<8x8xf32> to vector<8x8xbf16>
      %c24 = arith.constant 24 : index
      %c0_40 = arith.constant 0 : index
      %56 = vector.load %arg11[%c24, %c0_40] : memref<32x8xbf16, #tpu.memory_space<vmem>>, vector<8x8xbf16>
      tpu.vector_store %arg11[%c24, %c0_40], %55 {strides = array<i32>} : memref<32x8xbf16, #tpu.memory_space<vmem>>, vector<8x8xbf16>,
      %cst_41 = arith.constant 0xFF800000 : f32
      %57 = vector.broadcast %cst_41 : f32 to vector<32x1xf32>
      %c0_42 = arith.constant 0 : index
      %c0_43 = arith.constant 0 : index
      %58 = vector.load %arg13[%c0_42, %c0_43] : memref<32x1xf32, #tpu.memory_space<vmem>>, vector<32x1xf32>
      tpu.vector_store %arg13[%c0_42, %c0_43], %57 {strides = array<i32>} : memref<32x1xf32, #tpu.memory_space<vmem>>, vector<32x1xf32>,
      %cst_44 = arith.constant 0.000000e+00 : f32
      %59 = vector.broadcast %cst_44 : f32 to vector<32x1xf32>
      %c0_45 = arith.constant 0 : index
      %c0_46 = arith.constant 0 : index
      %60 = vector.load %arg14[%c0_45, %c0_46] : memref<32x1xf32, #tpu.memory_space<vmem>>, vector<32x1xf32>
      tpu.vector_store %arg14[%c0_45, %c0_46], %59 {strides = array<i32>} : memref<32x1xf32, #tpu.memory_space<vmem>>, vector<32x1xf32>,
      %cst_47 = arith.constant 0.000000e+00 : f32
      %61 = vector.broadcast %cst_47 : f32 to vector<32x8xf32>
      %c0_48 = arith.constant 0 : index
      %c0_49 = arith.constant 0 : index
      %62 = vector.load %arg15[%c0_48, %c0_49] : memref<32x8xf32, #tpu.memory_space<vmem>>, vector<32x8xf32>
      tpu.vector_store %arg15[%c0_48, %c0_49], %61 {strides = array<i32>} : memref<32x8xf32, #tpu.memory_space<vmem>>, vector<32x8xf32>,
    } else {
    }
    %c0 = arith.constant 0 : index
    %c0_1 = arith.constant 0 : index
    %c0_2 = arith.constant 0 : index
    %3 = vector.load %arg4[%c0, %c0_1, %c0_2] : memref<1x8x8xbf16, #tpu.memory_space<vmem>>, vector<1x8x8xbf16>
    %4 = vector.shape_cast %3 : vector<1x8x8xbf16> to vector<8x8xbf16>
    %c0_3 = arith.constant 0 : index
    %c0_4 = arith.constant 0 : index
    %c0_5 = arith.constant 0 : index
    %5 = vector.load %arg5[%c0_3, %c0_4, %c0_5] : memref<1x8x8xbf16, #tpu.memory_space<vmem>>, vector<1x8x8xbf16>
    %6 = vector.shape_cast %5 : vector<1x8x8xbf16> to vector<8x8xbf16>
    %c0_6 = arith.constant 0 : index
    %c0_7 = arith.constant 0 : index
    %7 = vector.load %arg11[%c0_6, %c0_7] : memref<32x8xbf16, #tpu.memory_space<vmem>>, vector<32x8xbf16>
    %cst = arith.constant dense<0.000000e+00> : vector<32x8xf32>
    %8 = tpu.matmul %7, %4, %cst {dimension_numbers = #tpu.dot_dimension_numbers<[1], [1], [0], [0], [0, 0, 1, 0], [], []>} : vector<32x8xbf16>, vector<8x8xbf16>, vector<32x8xf32> -> vector<32x8xf32>
    %c0_8 = arith.constant 0 : index
    %c0_9 = arith.constant 0 : index
    %9 = vector.load %arg13[%c0_8, %c0_9] : memref<32x1xf32, #tpu.memory_space<vmem>>, vector<32x1xf32>
    %cst_10 = arith.constant dense<0xFF800000> : vector<32xf32>
    %10 = vector.multi_reduction <maximumf>, %8, %cst_10 [1] : vector<32x8xf32> to vector<32xf32>
    %11 = vector.shape_cast %10 : vector<32xf32> to vector<32x1xf32>
    %12 = arith.maximumf %9, %11 : vector<32x1xf32>
    %c0_11 = arith.constant 0 : index
    %c0_12 = arith.constant 0 : index
    %13 = vector.load %arg13[%c0_11, %c0_12] : memref<32x1xf32, #tpu.memory_space<vmem>>, vector<32x1xf32>
    %14 = arith.subf %13, %12 : vector<32x1xf32>
    %15 = math.exp %14 : vector<32x1xf32>
    %16 = vector.broadcast %12 : vector<32x1xf32> to vector<32x8xf32>
    %17 = arith.subf %8, %16 : vector<32x8xf32>
    %18 = math.exp %17 : vector<32x8xf32>
    %c0_13 = arith.constant 0 : index
    %c0_14 = arith.constant 0 : index
    %19 = vector.load %arg14[%c0_13, %c0_14] : memref<32x1xf32, #tpu.memory_space<vmem>>, vector<32x1xf32>
    %20 = arith.mulf %15, %19 : vector<32x1xf32>
    %cst_15 = arith.constant dense<0.000000e+00> : vector<32xf32>
    %21 = vector.multi_reduction <add>, %18, %cst_15 [1] : vector<32x8xf32> to vector<32xf32>
    %22 = vector.shape_cast %21 : vector<32xf32> to vector<32x1xf32>
    %23 = arith.addf %20, %22 : vector<32x1xf32>
    %c0_16 = arith.constant 0 : index
    %c0_17 = arith.constant 0 : index
    %24 = vector.load %arg14[%c0_16, %c0_17] : memref<32x1xf32, #tpu.memory_space<vmem>>, vector<32x1xf32>
    tpu.vector_store %arg14[%c0_16, %c0_17], %23 {strides = array<i32>} : memref<32x1xf32, #tpu.memory_space<vmem>>, vector<32x1xf32>,
    %c0_18 = arith.constant 0 : index
    %c0_19 = arith.constant 0 : index
    %25 = vector.load %arg15[%c0_18, %c0_19] : memref<32x8xf32, #tpu.memory_space<vmem>>, vector<32x8xf32>
    %26 = vector.broadcast %15 : vector<32x1xf32> to vector<32x8xf32>
    %27 = arith.mulf %26, %25 : vector<32x8xf32>
    %28 = arith.truncf %18 : vector<32x8xf32> to vector<32x8xbf16>
    %cst_20 = arith.constant dense<0.000000e+00> : vector<32x8xf32>
    %29 = tpu.matmul %28, %6, %cst_20 {dimension_numbers = #tpu.dot_dimension_numbers<[1], [0], [0], [1], [0, 0, 1, 1], [], []>} : vector<32x8xbf16>, vector<8x8xbf16>, vector<32x8xf32> -> vector<32x8xf32>
    %30 = arith.addf %27, %29 : vector<32x8xf32>
    %c0_21 = arith.constant 0 : index
    %c0_22 = arith.constant 0 : index
    %31 = vector.load %arg15[%c0_21, %c0_22] : memref<32x8xf32, #tpu.memory_space<vmem>>, vector<32x8xf32>
    tpu.vector_store %arg15[%c0_21, %c0_22], %30 {strides = array<i32>} : memref<32x8xf32, #tpu.memory_space<vmem>>, vector<32x8xf32>,
    %c0_23 = arith.constant 0 : index
    %c0_24 = arith.constant 0 : index
    %32 = vector.load %arg13[%c0_23, %c0_24] : memref<32x1xf32, #tpu.memory_space<vmem>>, vector<32x1xf32>
    tpu.vector_store %arg13[%c0_23, %c0_24], %12 {strides = array<i32>} : memref<32x1xf32, #tpu.memory_space<vmem>>, vector<32x1xf32>,
    %c0_i32_25 = arith.constant 0 : i32
    %33 = arith.cmpi eq, %arg2, %c0_i32_25 : i32
    %34 = arith.extui %33 : i1 to i32
    %c0_i32_26 = arith.constant 0 : i32
    %35 = arith.cmpi ne, %34, %c0_i32_26 : i32
    scf.if %35 {
      %c0_27 = arith.constant 0 : index
      %c0_28 = arith.constant 0 : index
      %36 = vector.load %arg15[%c0_27, %c0_28] : memref<32x8xf32, #tpu.memory_space<vmem>>, vector<32x8xf32>
      %c0_29 = arith.constant 0 : index
      %c0_30 = arith.constant 0 : index
      %37 = vector.load %arg14[%c0_29, %c0_30] : memref<32x1xf32, #tpu.memory_space<vmem>>, vector<32x1xf32>
      %38 = tpu.reciprocal %37 {approx = true} : vector<32x1xf32> -> vector<32x1xf32>
      %39 = vector.broadcast %38 : vector<32x1xf32> to vector<32x8xf32>
      %40 = arith.mulf %36, %39 : vector<32x8xf32>
      %41 = vector.extract_strided_slice %40 {offsets = [0, 0], sizes = [8, 8], strides = [1, 1]} : vector<32x8xf32> to vector<8x8xf32>
      %42 = arith.truncf %41 : vector<8x8xf32> to vector<8x8xbf16>
      %c0_31 = arith.constant 0 : index
      %c0_32 = arith.constant 0 : index
      %43 = vector.load %arg12[%c0_31, %c0_32] : memref<8x32xbf16, #tpu.memory_space<vmem>>, vector<8x8xbf16>
      tpu.vector_store %arg12[%c0_31, %c0_32], %42 {strides = array<i32>} : memref<8x32xbf16, #tpu.memory_space<vmem>>, vector<8x8xbf16>,
      %44 = vector.extract_strided_slice %40 {offsets = [8, 0], sizes = [8, 8], strides = [1, 1]} : vector<32x8xf32> to vector<8x8xf32>
      %45 = arith.truncf %44 : vector<8x8xf32> to vector<8x8xbf16>
      %c0_33 = arith.constant 0 : index
      %c8 = arith.constant 8 : index
      %46 = vector.load %arg12[%c0_33, %c8] : memref<8x32xbf16, #tpu.memory_space<vmem>>, vector<8x8xbf16>
      tpu.vector_store %arg12[%c0_33, %c8], %45 {strides = array<i32>} : memref<8x32xbf16, #tpu.memory_space<vmem>>, vector<8x8xbf16>,
      %47 = vector.extract_strided_slice %40 {offsets = [16, 0], sizes = [8, 8], strides = [1, 1]} : vector<32x8xf32> to vector<8x8xf32>
      %48 = arith.truncf %47 : vector<8x8xf32> to vector<8x8xbf16>
      %c0_34 = arith.constant 0 : index
      %c16 = arith.constant 16 : index
      %49 = vector.load %arg12[%c0_34, %c16] : memref<8x32xbf16, #tpu.memory_space<vmem>>, vector<8x8xbf16>
      tpu.vector_store %arg12[%c0_34, %c16], %48 {strides = array<i32>} : memref<8x32xbf16, #tpu.memory_space<vmem>>, vector<8x8xbf16>,
      %50 = vector.extract_strided_slice %40 {offsets = [24, 0], sizes = [8, 8], strides = [1, 1]} : vector<32x8xf32> to vector<8x8xf32>
      %51 = arith.truncf %50 : vector<8x8xf32> to vector<8x8xbf16>
      %c0_35 = arith.constant 0 : index
      %c24 = arith.constant 24 : index
      %52 = vector.load %arg12[%c0_35, %c24] : memref<8x32xbf16, #tpu.memory_space<vmem>>, vector<8x8xbf16>
      tpu.vector_store %arg12[%c0_35, %c24], %51 {strides = array<i32>} : memref<8x32xbf16, #tpu.memory_space<vmem>>, vector<8x8xbf16>,
      %c0_36 = arith.constant 0 : index
      %c0_37 = arith.constant 0 : index
      %53 = vector.load %arg12[%c0_36, %c0_37] : memref<8x32xbf16, #tpu.memory_space<vmem>>, vector<8x32xbf16>
      %c0_38 = arith.constant 0 : index
      %c0_39 = arith.constant 0 : index
      %54 = vector.load %arg8[%c0_38, %c0_39] : memref<32x128xbf16, #tpu.memory_space<vmem>>, vector<32x128xbf16>
      %cst_40 = arith.constant dense<0.000000e+00> : vector<8x128xf32>
      %55 = tpu.matmul %53, %54, %cst_40 {dimension_numbers = #tpu.dot_dimension_numbers<[1], [0], [0], [1], [0, 0, 1, 1], [], []>} : vector<8x32xbf16>, vector<32x128xbf16>, vector<8x128xf32> -> vector<8x128xf32>
      %c0_41 = arith.constant 0 : index
      %c0_42 = arith.constant 0 : index
      %56 = vector.load %arg9[%c0_41, %c0_42] : memref<1x128xf32, #tpu.memory_space<vmem>>, vector<1x128xf32>
      %57 = vector.broadcast %56 : vector<1x128xf32> to vector<8x128xf32>
      %58 = arith.addf %55, %57 : vector<8x128xf32>
      %c0_43 = arith.constant 0 : index
      %c0_44 = arith.constant 0 : index
      %c0_45 = arith.constant 0 : index
      %59 = vector.load %arg10[%c0_43, %c0_44, %c0_45] : memref<1x8x128xf32, #tpu.memory_space<vmem>>, vector<1x8x128xf32>
      %60 = vector.shape_cast %59 : vector<1x8x128xf32> to vector<8x128xf32>
      %61 = vector.shape_cast %58 : vector<8x128xf32> to vector<1x8x128xf32>
      tpu.vector_store %arg10[%c0_43, %c0_44, %c0_45], %61 {strides = array<i32>} : memref<1x8x128xf32, #tpu.memory_space<vmem>>, vector<1x8x128xf32>,
    } else {
    }
    return
  }
  func.func @transform_0(%arg0: i32, %arg1: i32, %arg2: i32) -> (i32, i32, i32) {
    %c0_i32 = arith.constant 0 : i32
    %c0_i32_0 = arith.constant 0 : i32
    return %arg0, %arg1, %c0_i32 : i32, i32, i32
  }
  func.func @transform_1(%arg0: i32, %arg1: i32, %arg2: i32) -> (i32, i32, i32) {
    %c0_i32 = arith.constant 0 : i32
    %c0_i32_0 = arith.constant 0 : i32
    return %arg0, %arg2, %c0_i32 : i32, i32, i32
  }
  func.func @transform_2(%arg0: i32, %arg1: i32, %arg2: i32) -> (i32, i32, i32) {
    %c0_i32 = arith.constant 0 : i32
    %c0_i32_0 = arith.constant 0 : i32
    return %arg0, %arg2, %c0_i32 : i32, i32, i32
  }
  func.func @transform_3(%arg0: i32, %arg1: i32, %arg2: i32) -> (i32, i32) {
    %c0_i32 = arith.constant 0 : i32
    %c0_i32_0 = arith.constant 0 : i32
    %c0_i32_1 = arith.constant 0 : i32
    return %c0_i32, %c0_i32_0 : i32, i32
  }
  func.func @transform_4(%arg0: i32, %arg1: i32, %arg2: i32) -> (i32, i32) {
    %c0_i32 = arith.constant 0 : i32
    %c0_i32_0 = arith.constant 0 : i32
    %c0_i32_1 = arith.constant 0 : i32
    return %c0_i32, %c0_i32_0 : i32, i32
  }
  func.func @transform_5(%arg0: i32, %arg1: i32, %arg2: i32) -> (i32, i32) {
    %c0_i32 = arith.constant 0 : i32
    %c0_i32_0 = arith.constant 0 : i32
    %c0_i32_1 = arith.constant 0 : i32
    return %c0_i32, %c0_i32_0 : i32, i32
  }
  func.func @transform_6(%arg0: i32, %arg1: i32, %arg2: i32) -> (i32, i32) {
    %c0_i32 = arith.constant 0 : i32
    %c0_i32_0 = arith.constant 0 : i32
    %c0_i32_1 = arith.constant 0 : i32
    return %c0_i32, %c0_i32_0 : i32, i32
  }
  func.func @transform_7(%arg0: i32, %arg1: i32, %arg2: i32) -> (i32, i32, i32) {
    %c0_i32 = arith.constant 0 : i32
    %c0_i32_0 = arith.constant 0 : i32
    return %arg0, %arg1, %c0_i32 : i32, i32, i32
  }
}

</mosaic_0001>

<llo_original>
// kernel: tpu_custom_call.1
$region0: #{tpu_custom_call.1}
  #allocation0 [shape = 'u32[]', space=smem, size = 0x4, offset = 0x4, fixed_abs, tag = 'smem constant byte address 0x4 - core index']
  #allocation1 [shape = 'u32[144,128]{1,0:T(1,128)}', space=vmem, size = 0x12000, scoped, tag = 'internal scratch']
  #allocation2 [shape = 'bf16[32,8]{1,0:T(16,128)(2,1)}', space=vmem, size = 0x2000, scoped, tag = 'scratch operand']
  #allocation3 [shape = 'bf16[8,32]{1,0:T(8,128)(2,1)}', space=vmem, size = 0x800, scoped, tag = 'scratch operand']
  #allocation4 [shape = 'f32[32,1]{1,0:T(8,128)}', space=vmem, size = 0x4000, scoped, tag = 'scratch operand']
  #allocation5 [shape = 'f32[32,1]{1,0:T(8,128)}', space=vmem, size = 0x4000, scoped, tag = 'scratch operand']
  #allocation6 [shape = 'f32[32,8]{1,0:T(8,128)}', space=vmem, size = 0x4000, scoped, tag = 'scratch operand']
  %s0 = inlined_call_operand.hbm [shape: bf16[2,8,32], index: 0, kind: input, shape index: {}]
  %s1 = inlined_call_operand.hbm [shape: bf16[2,8,8], index: 1, kind: input, shape index: {}]
  %s2 = inlined_call_operand.hbm [shape: bf16[2,8,8], index: 2, kind: input, shape index: {}]
  %s3 = inlined_call_operand.hbm [shape: bf16[32,32], index: 3, kind: input, shape index: {}]
  %s4 = inlined_call_operand.vmem [shape: f32[1,32], index: 4, kind: input, shape index: {}]
  %s5 = inlined_call_operand.vmem [shape: bf16[32,128], index: 5, kind: input, shape index: {}]
  %s6 = inlined_call_operand.vmem [shape: f32[1,128], index: 6, kind: input, shape index: {}]
  %s7 = inlined_call_operand.hbm [shape: f32[2,8,128], index: 7, kind: output, shape index: {}]
  %s8 = sld [smem:[#allocation0]]
  $region85: #{tpu_custom_call.1} parent=0
    _
  %s10 = ssub.s32 1, %s8
  %s11 = scalar_select 0, %s10, %s8
  $region1: #{tpu_custom_call.1} parent=0
    #allocation7 [shape = 'u8[4096]{0}', space=vmem, size = 0x1000, scoped, tag = 'input window, operand 0']
    #allocation8 [shape = 's32[2]{0}', space=sflag, size = 0x8, scoped, tag = 'scoped memory for tpu_custom_call.1']
    #allocation9 [shape = 's32[2]{0}', space=sflag, size = 0x8, scoped, tag = 'scoped memory for tpu_custom_call.1']
    #allocation10 [shape = 'u8[4096]{0}', space=vmem, size = 0x1000, scoped, tag = 'input window, operand 1']
    #allocation11 [shape = 's32[2]{0}', space=sflag, size = 0x8, scoped, tag = 'scoped memory for tpu_custom_call.1']
    #allocation12 [shape = 'u8[4096]{0}', space=vmem, size = 0x1000, scoped, tag = 'input window, operand 2']
    #allocation13 [shape = 'u8[8192]{0}', space=vmem, size = 0x2000, scoped, tag = 'input window, operand 3, single buffered']
    #allocation14 [shape = 's32[1]{0}', space=sflag, size = 0x4, scoped, tag = 'scoped memory for tpu_custom_call.1']
    #allocation15 [shape = 'u8[8192]{0}', space=vmem, size = 0x2000, scoped, tag = 'output window, operand 0']
    %12 = vsyncpa [#allocation8], 0
    %s13 = scalar_lea.sflag [#allocation8], 1
    %14 = vsyncpa %s13, 0
    %15 = vsyncpa [#allocation11], 0
    %s16 = scalar_lea.sflag [#allocation11], 1
    %17 = vsyncpa %s16, 0
    %18 = vsyncpa [#allocation14], 0
    %19 = vsyncpa [#allocation9], 0
    %s20 = scalar_lea.sflag [#allocation9], 1
    %21 = vsyncpa %s20, 0
    loop: start=0, step=1, limit=4
    $region2: #{tpu_custom_call.1} parent=1 // loop_pre_header
      _
    $region3: #{tpu_custom_call.1} parent=1 // loop_header
      %s23 = sphi 0, %s27
      %p24 = scmp.ge.s32.totalorder %s23, 4
      %s30 = sphi 0, %s49
      %s31 = sphi 0, %s45
      %s32 = sphi 0, %s41
      %s33 = sphi 0, %s30
      %s34 = sphi 0, %s31
      %s35 = sphi 0, %s32
      %s36 = sphi 0, %s33
      %s37 = sphi 0, %s34
      %s38 = sphi 0, %s35
      %s54 = sphi 0, %s56
      %s57 = sphi 0, %s54
      %s58 = sphi 0, %s57
      %s74 = sphi 0, %s58
      %s82 = sphi 0, %s84
      %s85 = sphi 0, %s82
      %s86 = sphi 0, %s85
      %s102 = sphi 0, %s86
      %s110 = sphi 0, %s112
      %s113 = sphi 0, %s110
      %s114 = sphi 0, %s113
      %s130 = sphi 0, %s114
      %s134 = sphi 0, %s134
      %s136 = sphi 0, %s134
      %s137 = sphi 0, %s136
      %s151 = sphi 0, %s137
      %s155 = sphi 0, %s155
      %s157 = sphi 0, %s155
      %s158 = sphi 0, %s157
      %s172 = sphi 0, %s158
      %s176 = sphi 0, %s176
      %s178 = sphi 0, %s176
      %s179 = sphi 0, %s178
      %s193 = sphi 0, %s179
      %s197 = sphi 0, %s197
      %s199 = sphi 0, %s197
      %s200 = sphi 0, %s199
      %s214 = sphi 0, %s200
      %s222 = sphi 0, %s224
      %s225 = sphi 0, %s222
      %s226 = sphi 0, %s225
      %s242 = sphi 0, %s226
    $region4: #{tpu_custom_call.1} parent=1 // loop_header_branch
      %26 = sbr.rel (%p24) target = $region8
    $region5: #{tpu_custom_call.1} parent=1 // loop_body
      %s28 = ssub.s32 %s23, 1
      %s29 = ssub.s32 %s23, 2
      %s39 = sadd.s32 1, %s32
      %p40 = scmp.ge.s32.totalorder %s39, 1
      %s41 = scalar_select %p40, 0, %s39
      %s42 = sadd.s32 1, %s31
      %s43 = scalar_select %p40, %s42, %s31
      %p44 = scmp.ge.s32.totalorder %s43, 1
      %s45 = scalar_select %p44, 0, %s43
      %s46 = sadd.s32 1, %s30
      %s47 = scalar_select %p44, %s46, %s30
      %p48 = scmp.ge.s32.totalorder %s47, 2
      %s49 = scalar_select %p48, 0, %s47
      %s50 = ssub.s32 %s30, %s49
      %s51 = ssub.s32 %s31, %s45
      %s52 = sor.u32 %s50, %s51
      %p53 = scmp.eq.s32.totalorder %s52, 0
      %s55 = sadd.s32 %s54, 1
      %s56 = scalar_select %p53, %s54, %s55
      %p59 = pneg %p53
      %p60 = scmp.eq.s32.totalorder %s23, 1
      %p61 = por %p59, %p60
      %p62 = scmp.ne.s32.totalorder %s54, %s57
      %p63 = scmp.eq.s32.totalorder %s23, 0
      %p64 = por %p62, %p63
      %p65 = scmp.ne.s32.totalorder %s54, %s57
      %p66 = scmp.eq.s32.totalorder %s28, 1
      %p67 = por %p65, %p66
      %p68 = scmp.ne.s32.totalorder %s57, %s58
      %p69 = scmp.eq.s32.totalorder %s28, 0
      %p70 = por %p68, %p69
      %p71 = scmp.ne.s32.totalorder %s57, %s58
      %p72 = scmp.eq.s32.totalorder %s29, 1
      %p73 = por %p71, %p72
      %p75 = scmp.ne.s32.totalorder %s58, %s74
      %p76 = scmp.eq.s32.totalorder %s29, 0
      %p77 = por %p75, %p76
      %s78 = ssub.s32 %s30, %s49
      %s79 = ssub.s32 %s32, %s41
      %s80 = sor.u32 %s78, %s79
      %p81 = scmp.eq.s32.totalorder %s80, 0
      %s83 = sadd.s32 %s82, 1
      %s84 = scalar_select %p81, %s82, %s83
      %p87 = pneg %p81
      %p88 = scmp.eq.s32.totalorder %s23, 1
      %p89 = por %p87, %p88
      %p90 = scmp.ne.s32.totalorder %s82, %s85
      %p91 = scmp.eq.s32.totalorder %s23, 0
      %p92 = por %p90, %p91
      %p93 = scmp.ne.s32.totalorder %s82, %s85
      %p94 = scmp.eq.s32.totalorder %s28, 1
      %p95 = por %p93, %p94
      %p96 = scmp.ne.s32.totalorder %s85, %s86
      %p97 = scmp.eq.s32.totalorder %s28, 0
      %p98 = por %p96, %p97
      %p99 = scmp.ne.s32.totalorder %s85, %s86
      %p100 = scmp.eq.s32.totalorder %s29, 1
      %p101 = por %p99, %p100
      %p103 = scmp.ne.s32.totalorder %s86, %s102
      %p104 = scmp.eq.s32.totalorder %s29, 0
      %p105 = por %p103, %p104
      %s106 = ssub.s32 %s30, %s49
      %s107 = ssub.s32 %s32, %s41
      %s108 = sor.u32 %s106, %s107
      %p109 = scmp.eq.s32.totalorder %s108, 0
      %s111 = sadd.s32 %s110, 1
      %s112 = scalar_select %p109, %s110, %s111
      %p115 = pneg %p109
      %p116 = scmp.eq.s32.totalorder %s23, 1
      %p117 = por %p115, %p116
      %p118 = scmp.ne.s32.totalorder %s110, %s113
      %p119 = scmp.eq.s32.totalorder %s23, 0
      %p120 = por %p118, %p119
      %p121 = scmp.ne.s32.totalorder %s110, %s113
      %p122 = scmp.eq.s32.totalorder %s28, 1
      %p123 = por %p121, %p122
      %p124 = scmp.ne.s32.totalorder %s113, %s114
      %p125 = scmp.eq.s32.totalorder %s28, 0
      %p126 = por %p124, %p125
      %p127 = scmp.ne.s32.totalorder %s113, %s114
      %p128 = scmp.eq.s32.totalorder %s29, 1
      %p129 = por %p127, %p128
      %p131 = scmp.ne.s32.totalorder %s114, %s130
      %p132 = scmp.eq.s32.totalorder %s29, 0
      %p133 = por %p131, %p132
      %s135 = sadd.s32 %s134, 1
      %p138 = scmp.eq.s32.totalorder %s23, 1
      %p139 = scmp.ne.s32.totalorder %s134, %s136
      %p140 = scmp.eq.s32.totalorder %s23, 0
      %p141 = por %p139, %p140
      %p142 = scmp.ne.s32.totalorder %s134, %s136
      %p143 = scmp.eq.s32.totalorder %s28, 1
      %p144 = por %p142, %p143
      %p145 = scmp.ne.s32.totalorder %s136, %s137
      %p146 = scmp.eq.s32.totalorder %s28, 0
      %p147 = por %p145, %p146
      %p148 = scmp.ne.s32.totalorder %s136, %s137
      %p149 = scmp.eq.s32.totalorder %s29, 1
      %p150 = por %p148, %p149
      %p152 = scmp.ne.s32.totalorder %s137, %s151
      %p153 = scmp.eq.s32.totalorder %s29, 0
      %p154 = por %p152, %p153
      %s156 = sadd.s32 %s155, 1
      %p159 = scmp.eq.s32.totalorder %s23, 1
      %p160 = scmp.ne.s32.totalorder %s155, %s157
      %p161 = scmp.eq.s32.totalorder %s23, 0
      %p162 = por %p160, %p161
      %p163 = scmp.ne.s32.totalorder %s155, %s157
      %p164 = scmp.eq.s32.totalorder %s28, 1
      %p165 = por %p163, %p164
      %p166 = scmp.ne.s32.totalorder %s157, %s158
      %p167 = scmp.eq.s32.totalorder %s28, 0
      %p168 = por %p166, %p167
      %p169 = scmp.ne.s32.totalorder %s157, %s158
      %p170 = scmp.eq.s32.totalorder %s29, 1
      %p171 = por %p169, %p170
      %p173 = scmp.ne.s32.totalorder %s158, %s172
      %p174 = scmp.eq.s32.totalorder %s29, 0
      %p175 = por %p173, %p174
      %s177 = sadd.s32 %s176, 1
      %p180 = scmp.eq.s32.totalorder %s23, 1
      %p181 = scmp.ne.s32.totalorder %s176, %s178
      %p182 = scmp.eq.s32.totalorder %s23, 0
      %p183 = por %p181, %p182
      %p184 = scmp.ne.s32.totalorder %s176, %s178
      %p185 = scmp.eq.s32.totalorder %s28, 1
      %p186 = por %p184, %p185
      %p187 = scmp.ne.s32.totalorder %s178, %s179
      %p188 = scmp.eq.s32.totalorder %s28, 0
      %p189 = por %p187, %p188
      %p190 = scmp.ne.s32.totalorder %s178, %s179
      %p191 = scmp.eq.s32.totalorder %s29, 1
      %p192 = por %p190, %p191
      %p194 = scmp.ne.s32.totalorder %s179, %s193
      %p195 = scmp.eq.s32.totalorder %s29, 0
      %p196 = por %p194, %p195
      %s198 = sadd.s32 %s197, 1
      %p201 = scmp.eq.s32.totalorder %s23, 1
      %p202 = scmp.ne.s32.totalorder %s197, %s199
      %p203 = scmp.eq.s32.totalorder %s23, 0
      %p204 = por %p202, %p203
      %p205 = scmp.ne.s32.totalorder %s197, %s199
      %p206 = scmp.eq.s32.totalorder %s28, 1
      %p207 = por %p205, %p206
      %p208 = scmp.ne.s32.totalorder %s199, %s200
      %p209 = scmp.eq.s32.totalorder %s28, 0
      %p210 = por %p208, %p209
      %p211 = scmp.ne.s32.totalorder %s199, %s200
      %p212 = scmp.eq.s32.totalorder %s29, 1
      %p213 = por %p211, %p212
      %p215 = scmp.ne.s32.totalorder %s200, %s214
      %p216 = scmp.eq.s32.totalorder %s29, 0
      %p217 = por %p215, %p216
      %s218 = ssub.s32 %s30, %s49
      %s219 = ssub.s32 %s31, %s45
      %s220 = sor.u32 %s218, %s219
      %p221 = scmp.eq.s32.totalorder %s220, 0
      %s223 = sadd.s32 %s222, 1
      %s224 = scalar_select %p221, %s222, %s223
      %p227 = pneg %p221
      %p228 = scmp.eq.s32.totalorder %s23, 1
      %p229 = por %p227, %p228
      %p230 = scmp.ne.s32.totalorder %s222, %s225
      %p231 = scmp.eq.s32.totalorder %s23, 0
      %p232 = por %p230, %p231
      %p233 = scmp.ne.s32.totalorder %s222, %s225
      %p234 = scmp.eq.s32.totalorder %s28, 1
      %p235 = por %p233, %p234
      %p236 = scmp.ne.s32.totalorder %s225, %s226
      %p237 = scmp.eq.s32.totalorder %s28, 0
      %p238 = por %p236, %p237
      %p239 = scmp.ne.s32.totalorder %s225, %s226
      %p240 = scmp.eq.s32.totalorder %s29, 1
      %p241 = por %p239, %p240
      %p243 = scmp.ne.s32.totalorder %s226, %s242
      %p244 = scmp.eq.s32.totalorder %s29, 0
      %p245 = por %p243, %p244
      %p246 = scmp.le.s32.totalorder 1, %s23
      %p247 = scmp.lt.s32.totalorder %s23, 3
      %p248 = pnand %p246, %p247
      %p249 = pneg %p248
      // Predicated region
      $region9: #{tpu_custom_call.1} parent=5 // pred_check
        _
      $region10: #{tpu_custom_call.1} parent=5 // pred_check_branch
        %251 = sbr.rel (%p248) target = $region12
      $region11: #{tpu_custom_call.1} parent=5 // pred_region
        %s252 = ssub.s32 %s23, 1
        // Predicated region
        $region13: #{tpu_custom_call.1} parent=11 // pred_check
          %p253 = pneg %p147
        $region14: #{tpu_custom_call.1} parent=11 // pred_check_branch
          %255 = sbr.rel (%p253) target = $region16
        $region15: #{tpu_custom_call.1} parent=11 // pred_region
          %s257 = ssub.s32 256, 256
          %258 = vsyncadd [#allocation14], %s257
          %s259 = sshll.u32 [#allocation13], 4
          %s260 = int_to_ptr.vmem [resolvable:$true] %s259
          %265 = dma.hbm_to_vmem [thread:$0]  %s3, 256, %s260, [#allocation14], 64, 64, 4
        $region16: #{tpu_custom_call.1} parent=11 // pred_fallthru
          _
        // Predicated region
        $region17: #{tpu_custom_call.1} parent=11 // pred_check
          %p266 = pneg %p168
        $region18: #{tpu_custom_call.1} parent=11 // pred_check_branch
          %268 = sbr.rel (%p266) target = $region20
        $region19: #{tpu_custom_call.1} parent=11 // pred_region
          _
        $region20: #{tpu_custom_call.1} parent=11 // pred_fallthru
          _
        // Predicated region
        $region21: #{tpu_custom_call.1} parent=11 // pred_check
          %p269 = pneg %p189
        $region22: #{tpu_custom_call.1} parent=11 // pred_check_branch
          %271 = sbr.rel (%p269) target = $region24
        $region23: #{tpu_custom_call.1} parent=11 // pred_region
          _
        $region24: #{tpu_custom_call.1} parent=11 // pred_fallthru
          _
        // Predicated region
        $region25: #{tpu_custom_call.1} parent=11 // pred_check
          %p272 = pneg %p210
        $region26: #{tpu_custom_call.1} parent=11 // pred_check_branch
          %274 = sbr.rel (%p272) target = $region28
        $region27: #{tpu_custom_call.1} parent=11 // pred_region
          _
        $region28: #{tpu_custom_call.1} parent=11 // pred_fallthru
          _
      $region12: #{tpu_custom_call.1} parent=5 // pred_fallthru
        _
      %p275 = scmp.lt.s32.totalorder %s23, 2
      // Predicated region
      $region29: #{tpu_custom_call.1} parent=5 // pred_check
        %p276 = pneg %p275
      $region30: #{tpu_custom_call.1} parent=5 // pred_check_branch
        %278 = sbr.rel (%p276) target = $region32
      $region31: #{tpu_custom_call.1} parent=5 // pred_region
        // Predicated region
        $region33: #{tpu_custom_call.1} parent=31 // pred_check
          %p279 = pneg %p64
        $region34: #{tpu_custom_call.1} parent=31 // pred_check_branch
          %281 = sbr.rel (%p279) target = $region36
        $region35: #{tpu_custom_call.1} parent=31 // pred_region
          %s282 = sand.u32 %s54, 1
          %s283 = scalar_lea.sflag [#allocation8], %s282
          %s284 = sand.u32 %s54, 1
          %s285 = smul.addr %s284, 4
          %s286 = scalar_lea.vmem [#allocation7], %s285
          %s288 = ssub.s32 64, 64
          %289 = vsyncadd %s283, %s288
          %s290 = sadd.s32 %s31, %s30
          %s291 = smul.addr %s290, 64
          %s292 = scalar_lea.hbm %s0, %s291
          %s294 = sshll.u32 %s286, 4
          %s295 = int_to_ptr.vmem [resolvable:$true] %s294
          %297 = dma.hbm_to_vmem [thread:$0]  %s292, 64, %s295, %s283
        $region36: #{tpu_custom_call.1} parent=31 // pred_fallthru
          _
        // Predicated region
        $region37: #{tpu_custom_call.1} parent=31 // pred_check
          %p298 = pneg %p92
        $region38: #{tpu_custom_call.1} parent=31 // pred_check_branch
          %300 = sbr.rel (%p298) target = $region40
        $region39: #{tpu_custom_call.1} parent=31 // pred_region
          %s301 = sand.u32 %s23, 1
          %s302 = scalar_lea.sflag [#allocation11], %s301
          %s303 = sand.u32 %s82, 1
          %s304 = smul.addr %s303, 4
          %s305 = scalar_lea.vmem [#allocation10], %s304
          %s307 = ssub.s32 64, 64
          %308 = vsyncadd %s302, %s307
          %s309 = sadd.s32 %s32, %s30
          %s310 = smul.addr %s309, 64
          %s311 = scalar_lea.hbm %s1, %s310
          %s313 = sshll.u32 %s305, 4
          %s314 = int_to_ptr.vmem [resolvable:$true] %s313
          %316 = dma.hbm_to_vmem [thread:$0]  %s311, 64, %s314, %s302
        $region40: #{tpu_custom_call.1} parent=31 // pred_fallthru
          _
        // Predicated region
        $region41: #{tpu_custom_call.1} parent=31 // pred_check
          %p317 = pneg %p120
        $region42: #{tpu_custom_call.1} parent=31 // pred_check_branch
          %319 = sbr.rel (%p317) target = $region44
        $region43: #{tpu_custom_call.1} parent=31 // pred_region
          %s320 = sand.u32 %s23, 1
          %s321 = scalar_lea.sflag [#allocation11], %s320
          %s322 = sand.u32 %s110, 1
          %s323 = smul.addr %s322, 4
          %s324 = scalar_lea.vmem [#allocation12], %s323
          %s326 = ssub.s32 64, 64
          %327 = vsyncadd %s321, %s326
          %s328 = sadd.s32 %s32, %s30
          %s329 = smul.addr %s328, 64
          %s330 = scalar_lea.hbm %s2, %s329
          %s332 = sshll.u32 %s324, 4
          %s333 = int_to_ptr.vmem [resolvable:$true] %s332
          %335 = dma.hbm_to_vmem [thread:$0]  %s330, 64, %s333, %s321
        $region44: #{tpu_custom_call.1} parent=31 // pred_fallthru
          _
      $region32: #{tpu_custom_call.1} parent=5 // pred_fallthru
        _
      %p336 = scmp.le.s32.totalorder 1, %s23
      %p337 = scmp.lt.s32.totalorder %s23, 3
      %p338 = pnand %p336, %p337
      %p339 = pneg %p338
      // Predicated region
      $region45: #{tpu_custom_call.1} parent=5 // pred_check
        _
      $region46: #{tpu_custom_call.1} parent=5 // pred_check_branch
        %341 = sbr.rel (%p338) target = $region48
      $region47: #{tpu_custom_call.1} parent=5 // pred_region
        %s342 = ssub.s32 %s23, 1
        %s343 = sand.u32 %s57, 1
        %s344 = scalar_lea.sflag [#allocation8], %s343
        %s345 = sand.u32 %s57, 1
        %s346 = smul.addr %s345, 4
        %s347 = scalar_lea.vmem [#allocation7], %s346
        // Predicated region
        $region49: #{tpu_custom_call.1} parent=47 // pred_check
          %p348 = pneg %p70
        $region50: #{tpu_custom_call.1} parent=47 // pred_check_branch
          %350 = sbr.rel (%p348) target = $region52
        $region51: #{tpu_custom_call.1} parent=47 // pred_region
          %351 = dma.done %s344, 64
        $region52: #{tpu_custom_call.1} parent=47 // pred_fallthru
          _
        %s352 = sand.u32 %s28, 1
        %s353 = scalar_lea.sflag [#allocation11], %s352
        %s354 = sand.u32 %s85, 1
        %s355 = smul.addr %s354, 4
        %s356 = scalar_lea.vmem [#allocation10], %s355
        // Predicated region
        $region53: #{tpu_custom_call.1} parent=47 // pred_check
          %p357 = pneg %p98
        $region54: #{tpu_custom_call.1} parent=47 // pred_check_branch
          %359 = sbr.rel (%p357) target = $region56
        $region55: #{tpu_custom_call.1} parent=47 // pred_region
          %360 = dma.done %s353, 64
        $region56: #{tpu_custom_call.1} parent=47 // pred_fallthru
          _
        %s361 = sand.u32 %s28, 1
        %s362 = scalar_lea.sflag [#allocation11], %s361
        %s363 = sand.u32 %s113, 1
        %s364 = smul.addr %s363, 4
        %s365 = scalar_lea.vmem [#allocation12], %s364
        // Predicated region
        $region57: #{tpu_custom_call.1} parent=47 // pred_check
          %p366 = pneg %p126
        $region58: #{tpu_custom_call.1} parent=47 // pred_check_branch
          %368 = sbr.rel (%p366) target = $region60
        $region59: #{tpu_custom_call.1} parent=47 // pred_region
          %369 = dma.done %s362, 64
        $region60: #{tpu_custom_call.1} parent=47 // pred_fallthru
          _
        // Predicated region
        $region61: #{tpu_custom_call.1} parent=47 // pred_check
          %p370 = pneg %p147
        $region62: #{tpu_custom_call.1} parent=47 // pred_check_branch
          %372 = sbr.rel (%p370) target = $region64
        $region63: #{tpu_custom_call.1} parent=47 // pred_region
          %373 = dma.done [#allocation14], 256
        $region64: #{tpu_custom_call.1} parent=47 // pred_fallthru
          _
        %s374 = sand.u32 %s57, 1
        %s375 = scalar_lea.sflag [#allocation8], %s374
        %s376 = sand.u32 %s57, 1
        %s377 = smul.addr %s376, 4
        %s378 = scalar_lea.vmem [#allocation7], %s377
        %p379 = pneg %p70
        %p380 = pneg %p67
        %s381 = sand.u32 %s28, 1
        %s382 = scalar_lea.sflag [#allocation11], %s381
        %s383 = sand.u32 %s85, 1
        %s384 = smul.addr %s383, 4
        %s385 = scalar_lea.vmem [#allocation10], %s384
        %p386 = pneg %p98
        %p387 = pneg %p95
        %s388 = sand.u32 %s28, 1
        %s389 = scalar_lea.sflag [#allocation11], %s388
        %s390 = sand.u32 %s113, 1
        %s391 = smul.addr %s390, 4
        %s392 = scalar_lea.vmem [#allocation12], %s391
        %p393 = pneg %p126
        %p394 = pneg %p123
        %p395 = pneg %p147
        %p396 = pneg %p144
        %p397 = pneg %p168
        %p398 = pneg %p165
        %p399 = pneg %p189
        %p400 = pneg %p186
        %p401 = pneg %p210
        %p402 = pneg %p207
        %p403 = pneg %p238
        %p404 = pneg %p235
        %s405 = sand.u32 %s225, 1
        %s406 = scalar_lea.sflag [#allocation9], %s405
        %s407 = sand.u32 %s225, 1
        %s408 = smul.addr %s407, 8
        %s409 = scalar_lea.vmem [#allocation15], %s408
        %p411 = scmp.eq.s32.totalorder %s35, 0
        // Predicated region
        $region65: #{tpu_custom_call.1} parent=47 // pred_check
          %p412 = pneg %p411
        $region66: #{tpu_custom_call.1} parent=47 // pred_check_branch
          %414 = sbr.rel (%p412) target = $region68
        $region67: #{tpu_custom_call.1} parent=47 // pred_region
          %v415 = vld [vmem:[%s347] sm:$0xf]
          %v416 = vld [vmem:[#allocation13] sm:$0xf]
          %v417 = vld [vmem:[#allocation13 + $0x4] sm:$0xf]
          %v418 = vld [vmem:[#allocation13 + $0x8] sm:$0xf]
          %v419 = vld [vmem:[#allocation13 + $0xc] sm:$0xf]
          %v420 = vld [vmem:[%s4] sm:$0x1]
          %v422 = vlaneseq
          %v423 = vshrl.u32 %v422, 7
          %v424 = vsub.s32 0, %v423
          %v425 = vrot.slane %v420, %v424
          %v431 = vunpack.c.l.b16 %v416
          %v432 = vunpack.c.l.b16 %v417
          %v433 = vunpack.c.l.b16 %v418
          %v434 = vunpack.c.l.b16 %v419
          %v435 = vpack.c.b16 %v432, %v431
          %v436 = vpack.c.b16 %v434, %v433
          %vm439 = vcmask 261120
          %v441 = vsel %vm439, %v415, 0
          %443 = vmatprep.subr.bf16.mxu0 0
          %444 = vmatpush1.bf16.msra.mxu0 %v435
          %445 = vmatprep.subr.bf16.mxu0 0
          %446 = vmatpush1.bf16.msra.mxu0 %v436
          %447 = vmatprep.subr.bf16.mxu0 0
          %448 = vmatpush1.bf16.msra.mxu0 0
          %449 = vmatprep.subr.bf16.mxu0 0
          %450 = vmatpush1.bf16.msra.mxu0 0
          %451 = vmatprep.subr.bf16.mxu0 0
          %452 = vmatpush1.bf16.msra.mxu0 0
          %453 = vmatprep.subr.bf16.mxu0 0
          %454 = vmatpush1.bf16.msra.mxu0 0
          %455 = vmatprep.subr.bf16.mxu0 0
          %456 = vmatpush1.bf16.msra.mxu0 0
          %457 = vmatprep.subr.bf16.mxu0 0
          %458 = vmatpush1.bf16.msra.mxu0 0
          %459 = vmatprep.subr.bf16.mxu0 0
          %460 = vmatpush1.bf16.msra.mxu0 0
          %461 = vmatprep.subr.bf16.mxu0 0
          %462 = vmatpush1.bf16.msra.mxu0 0
          %463 = vmatprep.subr.bf16.mxu0 0
          %464 = vmatpush1.bf16.msra.mxu0 0
          %465 = vmatprep.subr.bf16.mxu0 0
          %466 = vmatpush1.bf16.msra.mxu0 0
          %467 = vmatprep.subr.bf16.mxu0 0
          %468 = vmatpush1.bf16.msra.mxu0 0
          %469 = vmatprep.subr.bf16.mxu0 0
          %470 = vmatpush1.bf16.msra.mxu0 0
          %471 = vmatprep.subr.bf16.mxu0 0
          %472 = vmatpush1.bf16.msra.mxu0 0
          %473 = vmatprep.subr.bf16.mxu0 0
          %474 = vmatpush1.bf16.msra.mxu0 0
          %475 = vmatprep.mubr.bf16.mxu0 0
          %476 = vmatmul.mubr.bf16.gmra.mrb[0].mxu0 %v441
          %v477 = vpop.f32.mrb[0].mxu0
          %v478 = vadd.f32 %v425, %v477
          %v479 = vpop.f32.mrb[0].mxu0
          %v480 = vpop.f32.mrb[0].mxu0
          %v481 = vpop.f32.mrb[0].mxu0
          %482 = vdwg.mxu0
          %v483 = vmul.f32 %v478, 0.17677669
          %v484 = vpack.c.bf16 %v483, %v483
          %vm485 = vcmask 60416
          %486 = vst.msk [vmem:[#allocation2] sm:$0xf] %vm485, %v484
          %v488 = vrot.slane %v484, 4
          %489 = vrot.lane.b32.xlu0 %v488, 120
          %v490 = vpop.permute.xlu0 %489
          %vm492 = vcmask 64516
          %493 = vst.msk [vmem:[#allocation2] sm:$0xf0] %vm492, %v490
          %494 = vrot.lane.b32.xlu0 %v484, 112
          %v495 = vpop.permute.xlu0 %494
          %497 = vst.msk [vmem:[#allocation2 + $0x8] sm:$0xf] %vm485, %v495
          %498 = vrot.lane.b32.xlu0 %v488, 104
          %v499 = vpop.permute.xlu0 %498
          %501 = vst.msk [vmem:[#allocation2 + $0x8] sm:$0xf0] %vm492, %v499
          %vm502 = vcmask 7168
          %503 = vst.msk [vmem:[#allocation4] sm:$0xff] %vm502, -inf
          %504 = vst.msk [vmem:[#allocation4 + $0x8] sm:$0xff] %vm502, -inf
          %505 = vst.msk [vmem:[#allocation4 + $0x10] sm:$0xff] %vm502, -inf
          %506 = vst.msk [vmem:[#allocation4 + $0x18] sm:$0xff] %vm502, -inf
          %507 = vst.msk [vmem:[#allocation5] sm:$0xff] %vm502, 0.0
          %508 = vst.msk [vmem:[#allocation5 + $0x8] sm:$0xff] %vm502, 0.0
          %509 = vst.msk [vmem:[#allocation5 + $0x10] sm:$0xff] %vm502, 0.0
          %510 = vst.msk [vmem:[#allocation5 + $0x18] sm:$0xff] %vm502, 0.0
          %vm511 = vcmask 64512
          %512 = vst.msk [vmem:[#allocation6] sm:$0xff] %vm511, 0.0
          %513 = vst.msk [vmem:[#allocation6 + $0x8] sm:$0xff] %vm511, 0.0
          %514 = vst.msk [vmem:[#allocation6 + $0x10] sm:$0xff] %vm511, 0.0
          %515 = vst.msk [vmem:[#allocation6 + $0x18] sm:$0xff] %vm511, 0.0
        $region68: #{tpu_custom_call.1} parent=47 // pred_fallthru
          _
        %v516 = vld [vmem:[%s356] sm:$0xf]
        %v517 = vld [vmem:[%s365] sm:$0xf]
        %v518 = vld [vmem:[#allocation2] sm:$0xff]
        %v519 = vld [vmem:[#allocation2 + $0x8] sm:$0xff]
        %vm520 = vcmask 64512
        %v522 = vsel %vm520, %v518, 0
        %v525 = vsel %vm520, %v519, 0
        %v528 = vsel %vm520, %v516, 0
        %530 = vmatprep.subr.bf16.mxu0 0
        %531 = vmatpush1.bf16.xpose.msra.mxu0 %v528
        %532 = vmatprep.subr.bf16.mxu0 0
        %533 = vmatpush1.bf16.xpose.msra.mxu0 0
        %534 = vmatprep.subr.bf16.mxu0 0
        %535 = vmatpush1.bf16.xpose.msra.mxu0 0
        %536 = vmatprep.subr.bf16.mxu0 0
        %537 = vmatpush1.bf16.xpose.msra.mxu0 0
        %538 = vmatprep.subr.bf16.mxu0 0
        %539 = vmatpush1.bf16.xpose.msra.mxu0 0
        %540 = vmatprep.subr.bf16.mxu0 0
        %541 = vmatpush1.bf16.xpose.msra.mxu0 0
        %542 = vmatprep.subr.bf16.mxu0 0
        %543 = vmatpush1.bf16.xpose.msra.mxu0 0
        %544 = vmatprep.subr.bf16.mxu0 0
        %545 = vmatpush1.bf16.xpose.msra.mxu0 0
        %546 = vmatprep.subr.bf16.mxu0 0
        %547 = vmatpush1.bf16.xpose.msra.mxu0 0
        %548 = vmatprep.subr.bf16.mxu0 0
        %549 = vmatpush1.bf16.xpose.msra.mxu0 0
        %550 = vmatprep.subr.bf16.mxu0 0
        %551 = vmatpush1.bf16.xpose.msra.mxu0 0
        %552 = vmatprep.subr.bf16.mxu0 0
        %553 = vmatpush1.bf16.xpose.msra.mxu0 0
        %554 = vmatprep.subr.bf16.mxu0 0
        %555 = vmatpush1.bf16.xpose.msra.mxu0 0
        %556 = vmatprep.subr.bf16.mxu0 0
        %557 = vmatpush1.bf16.xpose.msra.mxu0 0
        %558 = vmatprep.subr.bf16.mxu0 0
        %559 = vmatpush1.bf16.xpose.msra.mxu0 0
        %560 = vmatprep.subr.bf16.mxu0 0
        %561 = vmatpush1.bf16.xpose.msra.mxu0 0
        %562 = vmatprep.mubr.bf16.mxu0 0
        %563 = vmatmul.mubr.bf16.gmra.mrb[0].mxu0 %v522
        %v564 = vpop.f32.mrb[0].mxu0
        %v565 = vadd.f32 0.0, %v564
        %v566 = vpop.f32.mrb[0].mxu0
        %v567 = vpop.f32.mrb[0].mxu0
        %v568 = vadd.f32 0.0, %v567
        %v569 = vpop.f32.mrb[0].mxu0
        %570 = vmatprep.mubr.bf16.mxu0 0
        %571 = vmatmul.mubr.bf16.gmra.mrb[0].mxu0 %v525
        %v572 = vpop.f32.mrb[0].mxu0
        %v573 = vadd.f32 0.0, %v572
        %v574 = vpop.f32.mrb[0].mxu0
        %v575 = vpop.f32.mrb[0].mxu0
        %v576 = vadd.f32 0.0, %v575
        %v577 = vpop.f32.mrb[0].mxu0
        %578 = vdwg.mxu0
        %v579 = vld [vmem:[#allocation4] sm:$0xff]
        %v580 = vld [vmem:[#allocation4 + $0x8] sm:$0xff]
        %v581 = vld [vmem:[#allocation4 + $0x10] sm:$0xff]
        %v582 = vld [vmem:[#allocation4 + $0x18] sm:$0xff]
        %v583 = vsel %vm520, %v565, -inf
        %584 = vmax.xlane.f32.xlu0 %v583
        %v585 = vpop.xlane.xlu0 %584
        %v586 = vsel %vm520, %v568, -inf
        %587 = vmax.xlane.f32.xlu0 %v586
        %v588 = vpop.xlane.xlu0 %587
        %v589 = vsel %vm520, %v573, -inf
        %590 = vmax.xlane.f32.xlu0 %v589
        %v591 = vpop.xlane.xlu0 %590
        %v592 = vsel %vm520, %v576, -inf
        %593 = vmax.xlane.f32.xlu0 %v592
        %v594 = vpop.xlane.xlu0 %593
        %v595 = vmax.f32 %v579, %v585
        %v596 = vmax.f32 %v580, %v588
        %v597 = vmax.f32 %v581, %v591
        %v598 = vmax.f32 %v582, %v594
        %v599 = vsub.f32 %v579, %v595
        %v600 = vsub.f32 %v580, %v596
        %v601 = vsub.f32 %v581, %v597
        %v602 = vsub.f32 %v582, %v598
        %v603 = vmul.f32 %v599, 1.442695
        %v604 = vpow.pop %v603
        %v605 = vmul.f32 %v600, 1.442695
        %v606 = vpow.pop %v605
        %v607 = vmul.f32 %v601, 1.442695
        %v608 = vpow.pop %v607
        %v609 = vmul.f32 %v602, 1.442695
        %v610 = vpow.pop %v609
        %612 = vset.pattern.permute.xlu0 0
        %613 = vperm.xlu0 %612, %v595
        %v614 = vpop.permute.xlu0 %613
        %617 = vset.pattern.permute.xlu0 0
        %618 = vperm.xlu0 %617, %v596
        %v619 = vpop.permute.xlu0 %618
        %622 = vset.pattern.permute.xlu0 0
        %623 = vperm.xlu0 %622, %v597
        %v624 = vpop.permute.xlu0 %623
        %627 = vset.pattern.permute.xlu0 0
        %628 = vperm.xlu0 %627, %v598
        %v629 = vpop.permute.xlu0 %628
        %v631 = vsub.f32 %v565, %v614
        %v632 = vsub.f32 %v568, %v619
        %v633 = vsub.f32 %v573, %v624
        %v634 = vsub.f32 %v576, %v629
        %v635 = vmul.f32 %v631, 1.442695
        %v636 = vpow.pop %v635
        %v637 = vmul.f32 %v632, 1.442695
        %v638 = vpow.pop %v637
        %v639 = vmul.f32 %v633, 1.442695
        %v640 = vpow.pop %v639
        %v641 = vmul.f32 %v634, 1.442695
        %v642 = vpow.pop %v641
        %v643 = vld [vmem:[#allocation5] sm:$0xff]
        %v644 = vld [vmem:[#allocation5 + $0x8] sm:$0xff]
        %v645 = vld [vmem:[#allocation5 + $0x10] sm:$0xff]
        %v646 = vld [vmem:[#allocation5 + $0x18] sm:$0xff]
        %v647 = vmul.f32 %v604, %v643
        %v648 = vmul.f32 %v606, %v644
        %v649 = vmul.f32 %v608, %v645
        %v650 = vmul.f32 %v610, %v646
        %v651 = vsel %vm520, %v636, 0.0
        %652 = vadd.xlane.f32.xlu0 %v651
        %v653 = vpop.xlane.xlu0 %652
        %v654 = vsel %vm520, %v638, 0.0
        %655 = vadd.xlane.f32.xlu0 %v654
        %v656 = vpop.xlane.xlu0 %655
        %v657 = vsel %vm520, %v640, 0.0
        %658 = vadd.xlane.f32.xlu0 %v657
        %v659 = vpop.xlane.xlu0 %658
        %v660 = vsel %vm520, %v642, 0.0
        %661 = vadd.xlane.f32.xlu0 %v660
        %v662 = vpop.xlane.xlu0 %661
        %v663 = vadd.f32 %v647, %v653
        %v664 = vadd.f32 %v648, %v656
        %v665 = vadd.f32 %v649, %v659
        %v666 = vadd.f32 %v650, %v662
        %vm667 = vcmask 7168
        %668 = vst.msk [vmem:[#allocation5] sm:$0xff] %vm667, %v663
        %669 = vst.msk [vmem:[#allocation5 + $0x8] sm:$0xff] %vm667, %v664
        %670 = vst.msk [vmem:[#allocation5 + $0x10] sm:$0xff] %vm667, %v665
        %671 = vst.msk [vmem:[#allocation5 + $0x18] sm:$0xff] %vm667, %v666
        %v672 = vld [vmem:[#allocation6] sm:$0xff]
        %v673 = vld [vmem:[#allocation6 + $0x8] sm:$0xff]
        %v674 = vld [vmem:[#allocation6 + $0x10] sm:$0xff]
        %v675 = vld [vmem:[#allocation6 + $0x18] sm:$0xff]
        %677 = vset.pattern.permute.xlu0 0
        %678 = vperm.xlu0 %677, %v604
        %v679 = vpop.permute.xlu0 %678
        %682 = vset.pattern.permute.xlu0 0
        %683 = vperm.xlu0 %682, %v606
        %v684 = vpop.permute.xlu0 %683
        %687 = vset.pattern.permute.xlu0 0
        %688 = vperm.xlu0 %687, %v608
        %v689 = vpop.permute.xlu0 %688
        %692 = vset.pattern.permute.xlu0 0
        %693 = vperm.xlu0 %692, %v610
        %v694 = vpop.permute.xlu0 %693
        %v696 = vmul.f32 %v679, %v672
        %v697 = vmul.f32 %v684, %v673
        %v698 = vmul.f32 %v689, %v674
        %v699 = vmul.f32 %v694, %v675
        %v700 = vpack.c.bf16 %v638, %v636
        %v701 = vpack.c.bf16 %v642, %v640
        %v703 = vsel %vm520, %v700, 0
        %v706 = vsel %vm520, %v701, 0
        %vm708 = vcmask 1043456
        %v710 = vsel %vm708, %v517, 0
        %712 = vmatprep.subr.bf16.mxu0 0
        %713 = vmatpush1.bf16.msra.mxu0 %v710
        %714 = vmatprep.subr.bf16.mxu0 0
        %715 = vmatpush1.bf16.msra.mxu0 0
        %716 = vmatprep.subr.bf16.mxu0 0
        %717 = vmatpush1.bf16.msra.mxu0 0
        %718 = vmatprep.subr.bf16.mxu0 0
        %719 = vmatpush1.bf16.msra.mxu0 0
        %720 = vmatprep.subr.bf16.mxu0 0
        %721 = vmatpush1.bf16.msra.mxu0 0
        %722 = vmatprep.subr.bf16.mxu0 0
        %723 = vmatpush1.bf16.msra.mxu0 0
        %724 = vmatprep.subr.bf16.mxu0 0
        %725 = vmatpush1.bf16.msra.mxu0 0
        %726 = vmatprep.subr.bf16.mxu0 0
        %727 = vmatpush1.bf16.msra.mxu0 0
        %728 = vmatprep.subr.bf16.mxu0 0
        %729 = vmatpush1.bf16.msra.mxu0 0
        %730 = vmatprep.subr.bf16.mxu0 0
        %731 = vmatpush1.bf16.msra.mxu0 0
        %732 = vmatprep.subr.bf16.mxu0 0
        %733 = vmatpush1.bf16.msra.mxu0 0
        %734 = vmatprep.subr.bf16.mxu0 0
        %735 = vmatpush1.bf16.msra.mxu0 0
        %736 = vmatprep.subr.bf16.mxu0 0
        %737 = vmatpush1.bf16.msra.mxu0 0
        %738 = vmatprep.subr.bf16.mxu0 0
        %739 = vmatpush1.bf16.msra.mxu0 0
        %740 = vmatprep.subr.bf16.mxu0 0
        %741 = vmatpush1.bf16.msra.mxu0 0
        %742 = vmatprep.subr.bf16.mxu0 0
        %743 = vmatpush1.bf16.msra.mxu0 0
        %744 = vmatprep.mubr.bf16.mxu0 0
        %745 = vmatmul.mubr.bf16.gmra.mrb[0].mxu0 %v703
        %v746 = vpop.f32.mrb[0].mxu0
        %v747 = vadd.f32 0.0, %v746
        %v748 = vpop.f32.mrb[0].mxu0
        %v749 = vpop.f32.mrb[0].mxu0
        %v750 = vadd.f32 0.0, %v749
        %v751 = vpop.f32.mrb[0].mxu0
        %752 = vmatprep.mubr.bf16.mxu0 0
        %753 = vmatmul.mubr.bf16.gmra.mrb[0].mxu0 %v706
        %v754 = vpop.f32.mrb[0].mxu0
        %v755 = vadd.f32 0.0, %v754
        %v756 = vpop.f32.mrb[0].mxu0
        %v757 = vpop.f32.mrb[0].mxu0
        %v758 = vadd.f32 0.0, %v757
        %v759 = vpop.f32.mrb[0].mxu0
        %760 = vdwg.mxu0
        %v761 = vadd.f32 %v696, %v747
        %v762 = vadd.f32 %v697, %v750
        %v763 = vadd.f32 %v698, %v755
        %v764 = vadd.f32 %v699, %v758
        %765 = vst.msk [vmem:[#allocation6] sm:$0xff] %vm520, %v761
        %766 = vst.msk [vmem:[#allocation6 + $0x8] sm:$0xff] %vm520, %v762
        %767 = vst.msk [vmem:[#allocation6 + $0x10] sm:$0xff] %vm520, %v763
        %768 = vst.msk [vmem:[#allocation6 + $0x18] sm:$0xff] %vm520, %v764
        %769 = vst.msk [vmem:[#allocation4] sm:$0xff] %vm667, %v595
        %770 = vst.msk [vmem:[#allocation4 + $0x8] sm:$0xff] %vm667, %v596
        %771 = vst.msk [vmem:[#allocation4 + $0x10] sm:$0xff] %vm667, %v597
        %772 = vst.msk [vmem:[#allocation4 + $0x18] sm:$0xff] %vm667, %v598
        // Predicated region
        $region69: #{tpu_custom_call.1} parent=47 // pred_check
          %p773 = pneg %p411
        $region70: #{tpu_custom_call.1} parent=47 // pred_check_branch
          %775 = sbr.rel (%p773) target = $region72
        $region71: #{tpu_custom_call.1} parent=47 // pred_region
          %v776 = vld [vmem:[#allocation6] sm:$0xff]
          %v777 = vld [vmem:[#allocation6 + $0x8] sm:$0xff]
          %v778 = vld [vmem:[#allocation6 + $0x10] sm:$0xff]
          %v779 = vld [vmem:[#allocation6 + $0x18] sm:$0xff]
          %v780 = vld [vmem:[#allocation5] sm:$0xff]
          %v781 = vld [vmem:[#allocation5 + $0x8] sm:$0xff]
          %v782 = vld [vmem:[#allocation5 + $0x10] sm:$0xff]
          %v783 = vld [vmem:[#allocation5 + $0x18] sm:$0xff]
          %v784 = vrcp.pop %v780
          %v785 = vrcp.pop %v781
          %v786 = vrcp.pop %v782
          %v787 = vrcp.pop %v783
          %789 = vset.pattern.permute.xlu0 0
          %790 = vperm.xlu0 %789, %v784
          %v791 = vpop.permute.xlu0 %790
          %794 = vset.pattern.permute.xlu0 0
          %795 = vperm.xlu0 %794, %v785
          %v796 = vpop.permute.xlu0 %795
          %799 = vset.pattern.permute.xlu0 0
          %800 = vperm.xlu0 %799, %v786
          %v801 = vpop.permute.xlu0 %800
          %804 = vset.pattern.permute.xlu0 0
          %805 = vperm.xlu0 %804, %v787
          %v806 = vpop.permute.xlu0 %805
          %v808 = vmul.f32 %v776, %v791
          %v809 = vmul.f32 %v777, %v796
          %v810 = vmul.f32 %v778, %v801
          %v811 = vmul.f32 %v779, %v806
          %v812 = vpack.c.bf16 %v808, %v808
          %vm813 = vcmask 60416
          %814 = vst.msk [vmem:[#allocation3] sm:$0xf] %vm813, %v812
          %v815 = vpack.c.bf16 %v809, %v809
          %v817 = vunpack.c.l.b16 %v815
          %v818 = vpack.c.b16 %v817, %v817
          %819 = vrot.lane.b32.xlu0 %v818, 8
          %v820 = vpop.permute.xlu0 %819
          %vm822 = vcmask 126016
          %823 = vst.msk [vmem:[#allocation3] sm:$0xf] %vm822, %v820
          %v824 = vpack.c.bf16 %v810, %v810
          %v826 = vunpack.c.l.b16 %v824
          %v827 = vpack.c.b16 %v826, %v826
          %828 = vrot.lane.b32.xlu0 %v827, 16
          %v829 = vpop.permute.xlu0 %828
          %vm831 = vcmask 191616
          %832 = vst.msk [vmem:[#allocation3] sm:$0xf] %vm831, %v829
          %v833 = vpack.c.bf16 %v811, %v811
          %v835 = vunpack.c.l.b16 %v833
          %v836 = vpack.c.b16 %v835, %v835
          %837 = vrot.lane.b32.xlu0 %v836, 24
          %v838 = vpop.permute.xlu0 %837
          %vm840 = vcmask 257216
          %841 = vst.msk [vmem:[#allocation3] sm:$0xf] %vm840, %v838
          %v842 = vld [vmem:[#allocation3] sm:$0xf]
          %v843 = vld [vmem:[%s5] sm:$0xf]
          %v844 = vld [vmem:[%s5 + $0x4] sm:$0xf]
          %v845 = vld [vmem:[%s5 + $0x8] sm:$0xf]
          %v846 = vld [vmem:[%s5 + $0xc] sm:$0xf]
          %v847 = vld [vmem:[%s6] sm:$0x1]
          %v849 = vlaneseq
          %v850 = vshrl.u32 %v849, 7
          %v851 = vsub.s32 0, %v850
          %v852 = vrot.slane %v847, %v851
          %v858 = vunpack.c.l.b16 %v843
          %v859 = vunpack.c.l.b16 %v844
          %v860 = vunpack.c.l.b16 %v845
          %v861 = vunpack.c.l.b16 %v846
          %v862 = vpack.c.b16 %v859, %v858
          %v863 = vpack.c.b16 %v861, %v860
          %vm866 = vcmask 261120
          %v868 = vsel %vm866, %v842, 0
          %870 = vmatprep.subr.bf16.mxu0 0
          %871 = vmatpush1.bf16.msra.mxu0 %v862
          %872 = vmatprep.subr.bf16.mxu0 0
          %873 = vmatpush1.bf16.msra.mxu0 %v863
          %874 = vmatprep.subr.bf16.mxu0 0
          %875 = vmatpush1.bf16.msra.mxu0 0
          %876 = vmatprep.subr.bf16.mxu0 0
          %877 = vmatpush1.bf16.msra.mxu0 0
          %878 = vmatprep.subr.bf16.mxu0 0
          %879 = vmatpush1.bf16.msra.mxu0 0
          %880 = vmatprep.subr.bf16.mxu0 0
          %881 = vmatpush1.bf16.msra.mxu0 0
          %882 = vmatprep.subr.bf16.mxu0 0
          %883 = vmatpush1.bf16.msra.mxu0 0
          %884 = vmatprep.subr.bf16.mxu0 0
          %885 = vmatpush1.bf16.msra.mxu0 0
          %886 = vmatprep.subr.bf16.mxu0 0
          %887 = vmatpush1.bf16.msra.mxu0 0
          %888 = vmatprep.subr.bf16.mxu0 0
          %889 = vmatpush1.bf16.msra.mxu0 0
          %890 = vmatprep.subr.bf16.mxu0 0
          %891 = vmatpush1.bf16.msra.mxu0 0
          %892 = vmatprep.subr.bf16.mxu0 0
          %893 = vmatpush1.bf16.msra.mxu0 0
          %894 = vmatprep.subr.bf16.mxu0 0
          %895 = vmatpush1.bf16.msra.mxu0 0
          %896 = vmatprep.subr.bf16.mxu0 0
          %897 = vmatpush1.bf16.msra.mxu0 0
          %898 = vmatprep.subr.bf16.mxu0 0
          %899 = vmatpush1.bf16.msra.mxu0 0
          %900 = vmatprep.subr.bf16.mxu0 0
          %901 = vmatpush1.bf16.msra.mxu0 0
          %902 = vmatprep.mubr.bf16.mxu0 0
          %903 = vmatmul.mubr.bf16.gmra.mrb[0].mxu0 %v868
          %v904 = vpop.f32.mrb[0].mxu0
          %v905 = vadd.f32 %v852, %v904
          %v906 = vpop.f32.mrb[0].mxu0
          %v907 = vpop.f32.mrb[0].mxu0
          %v908 = vpop.f32.mrb[0].mxu0
          %909 = vdwg.mxu0
          %910 = vst [vmem:[%s409] sm:$0xff] %v905
        $region72: #{tpu_custom_call.1} parent=47 // pred_fallthru
          _
        %s911 = sand.u32 %s225, 1
        %s912 = scalar_lea.sflag [#allocation9], %s911
        %s913 = sand.u32 %s225, 1
        %s914 = smul.addr %s913, 8
        %s915 = scalar_lea.vmem [#allocation15], %s914
        // Predicated region
        $region73: #{tpu_custom_call.1} parent=47 // pred_check
          %p916 = pneg %p235
        $region74: #{tpu_custom_call.1} parent=47 // pred_check_branch
          %918 = sbr.rel (%p916) target = $region76
        $region75: #{tpu_custom_call.1} parent=47 // pred_region
          %s920 = ssub.s32 128, 128
          %921 = vsyncadd %s912, %s920
          %s922 = sadd.s32 %s34, %s33
          %s923 = smul.addr %s922, 128
          %s924 = scalar_lea.hbm %s7, %s923
          %s926 = sshll.u32 %s915, 4
          %s927 = int_to_ptr.vmem [resolvable:$true] %s926
          %929 = dma.vmem_to_hbm [thread:$0]  %s927, 128, %s924, %s912
        $region76: #{tpu_custom_call.1} parent=47 // pred_fallthru
          _
      $region48: #{tpu_custom_call.1} parent=5 // pred_fallthru
        _
      %p930 = scmp.le.s32.totalorder 2, %s23
      // Predicated region
      $region77: #{tpu_custom_call.1} parent=5 // pred_check
        %p931 = pneg %p930
      $region78: #{tpu_custom_call.1} parent=5 // pred_check_branch
        %933 = sbr.rel (%p931) target = $region80
      $region79: #{tpu_custom_call.1} parent=5 // pred_region
        %s934 = ssub.s32 %s23, 2
        // Predicated region
        $region81: #{tpu_custom_call.1} parent=79 // pred_check
          %p935 = pneg %p241
        $region82: #{tpu_custom_call.1} parent=79 // pred_check_branch
          %937 = sbr.rel (%p935) target = $region84
        $region83: #{tpu_custom_call.1} parent=79 // pred_region
          %s938 = sand.u32 %s226, 1
          %s939 = scalar_lea.sflag [#allocation9], %s938
          %s940 = sand.u32 %s226, 1
          %s941 = smul.addr %s940, 8
          %s942 = scalar_lea.vmem [#allocation15], %s941
          %943 = dma.done %s939, 128
        $region84: #{tpu_custom_call.1} parent=79 // pred_fallthru
          _
      $region80: #{tpu_custom_call.1} parent=5 // pred_fallthru
        _
    $region6: #{tpu_custom_call.1} parent=1 // loop_footer
      %s27 = sadd.s32 1, %s23
    $region7: #{tpu_custom_call.1} parent=1 // loop_footer_branch
      %22 = sbr.rel target = $region3
    $region8: #{tpu_custom_call.1} parent=1 // loop_exit
      _
    %944 = vsyncpa [#allocation8], 1
    %s945 = scalar_lea.sflag [#allocation8], 1
    %946 = vsyncpa %s945, 1
    %947 = vsyncpa [#allocation11], 1
    %s948 = scalar_lea.sflag [#allocation11], 1
    %949 = vsyncpa %s948, 1
    %950 = vsyncpa [#allocation14], 1
    %951 = vsyncpa [#allocation9], 1
    %s952 = scalar_lea.sflag [#allocation9], 1
    %953 = vsyncpa %s952, 1

</llo_original>
